<compile_context>
chip_gen: v7x
topology: tpu7x:2x2x1
jax: 0.10.0
libtpu: 0.0.40
codegen_flags: <defaults>
</compile_context>

<pallas_src>
import functools

import jax
import jax.numpy as jnp
from jax import lax
from jax.experimental import pallas as pl
from jax.experimental.pallas import tpu as pltpu

LANE = 128


def _cdiv(a, b):
    return -(-a // b)


def _round_up(x, m):
    return ((x + m - 1) // m) * m


def _vmem_capacity_bytes():
    """Per-TensorCore physical VMEM (generation aware), conservative fallback."""
    try:
        info = pltpu.get_tpu_info()
        for name in ("vmem_capacity_bytes", "vmem_size_bytes", "vmem_bytes"):
            val = getattr(info, name, None)
            if val:
                return int(val)
    except Exception:
        pass
    return 64 * 1024 * 1024  # v7x per-TC size: safe lower bound on every gen


def _choose_tiles(M, Np, Cp, feat_bytes, budget):
    """Pick (TM, TN, grid_m, grid_n, vmem_estimate_bytes)."""
    # --- column tiling: keep the whole (pre-transposed) target resident when
    #     it fits; otherwise stream double-buffered column slabs. ---
    grid_n, TN = 1, Np

    def tgt_bytes(tn, gn):
        bufs = 1 if gn == 1 else 2          # resident target is single-buffered
        return bufs * tn * Cp * feat_bytes

    while (tgt_bytes(TN, grid_n) > max(budget // 3, 2 * LANE * Cp * feat_bytes)
           and TN > LANE):
        grid_n += 1
        TN = _round_up(_cdiv(Np, grid_n), LANE)

    # --- row slab: largest that fits the budget, then padding-aware shrink. ---
    ru_m = _round_up(max(M, 1), 16)         # 16-row alignment for bf16 packing

    def estimate(tm):
        return (2 * tm * Cp * feat_bytes    # src slab (double-buffered)
                + tgt_bytes(TN, grid_n)     # resident / streamed target
                + 2 * tm * TN * 4           # squared-distance output slab
                + 2 * tm * LANE * 4         # per-row count output slab
                + 2 * tm * 4 + 2 * TN * 4   # bias vectors
                + (1 << 20))                # misc slack

    TM = 16
    for cand in (4096, 2048, 1024, 512, 256, 128, 64, 32, 16):
        TM = min(cand, ru_m)
        if estimate(TM) <= budget:
            break
    # TODO(synk): if even TM=16 overflows (huge Cp*TN), a K-tiled inner loop over
    # the feature axis would be needed; we just raise vmem_limit_bytes instead.

    # Distribute the M rows evenly over the slabs (minimize padded writeback).
    grid_m = _cdiv(M, TM)
    TM = _round_up(_cdiv(M, grid_m), 16)
    grid_m = _cdiv(M, TM)

    # Megacore: if the whole problem is a single grid step, split the column
    # axis so v7x's two TensorCores both get work (harmless on 1-TC chips).
    if (grid_m * grid_n == 1 and TN >= 2 * LANE and TN % (2 * LANE) == 0
            and M * TN >= (1 << 18)):
        TN //= 2
        grid_n = 2

    return TM, TN, grid_m, grid_n, estimate(TM)


def _sqdist_count_kernel(thr_sq, src_ref, tgtT_ref, rbias_ref, cbias_ref,
                         dist_ref, cnt_ref):
    """One (TM, TN) slab of squared distance max(2 - 2 * src @ tgt^T, 0).

    Masked / padded rows and columns are pushed to +inf via additive bias
    vectors, and a per-row count of entries <= threshold^2 is emitted.
    """
    # NN-form MXU matmul: tgt was pre-transposed to (Cp, TN) in the wrapper.
    dot = lax.dot_general(
        src_ref[...], tgtT_ref[...],
        dimension_numbers=(((1,), (0,)), ((), ())),
        preferred_element_type=jnp.float32)
    sq = jnp.maximum(2.0 - 2.0 * dot, 0.0)
    sq = sq + rbias_ref[...] + cbias_ref[...]       # +inf on invalid entries
    dist_ref[...] = sq

    # +inf never satisfies <= thr_sq, so this counts valid entries only.
    row_cnt = jnp.sum((sq <= thr_sq).astype(jnp.int32), axis=1, keepdims=True)
    cnt_ref[...] = jnp.broadcast_to(row_cnt, cnt_ref.shape)   # lane-dense store


def pairwise_sqdist_and_count(src_feats, tgt_feats, src_masks, tgt_masks,
                              similarity_threshold,
                              compute_dtype=jnp.bfloat16):
    """Returns (squared-dist (Mp, Np) f32 with +inf on invalid entries,
    per-row-per-colslab counts (Mp, grid_n*128) int32, Np)."""
    M, C = src_feats.shape
    N, _ = tgt_feats.shape
    Cp = _round_up(C, LANE)
    Np0 = _round_up(N, LANE)
    feat_bytes = jnp.dtype(compute_dtype).itemsize

    capacity = _vmem_capacity_bytes()
    budget = (3 * capacity) // 4
    TM, TN, grid_m, grid_n, est = _choose_tiles(M, Np0, Cp, feat_bytes, budget)
    Mp = grid_m * TM
    Np = grid_n * TN

    # Zero-pad + cast once (no-op for the dot product); target pre-transposed.
    src_p = jnp.pad(src_feats.astype(compute_dtype), ((0, Mp - M), (0, Cp - C)))
    tgtT_p = jnp.pad(tgt_feats.astype(compute_dtype).T,
                     ((0, Cp - C), (0, Np - N)))

    # Additive {0, +inf} bias vectors (replace in-kernel compare/select masks);
    # padded rows/cols also get +inf.
    if src_masks is None:
        rbias = jnp.zeros((M,), jnp.float32)
    else:
        rbias = jnp.where(src_masks, 0.0, jnp.inf).astype(jnp.float32)
    if tgt_masks is None:
        cbias = jnp.zeros((N,), jnp.float32)
    else:
        cbias = jnp.where(tgt_masks, 0.0, jnp.inf).astype(jnp.float32)
    rbias = jnp.pad(rbias, (0, Mp - M), constant_values=jnp.inf).reshape(Mp, 1)
    cbias = jnp.pad(cbias, (0, Np - N), constant_values=jnp.inf).reshape(1, Np)

    thr = float(similarity_threshold)
    thr_sq = thr * thr if thr >= 0.0 else -1.0       # d <= thr  <=>  sq <= thr^2
    kernel = functools.partial(_sqdist_count_kernel, thr_sq)

    # Always raise the scoped-VMEM limit (v5e's default is only 16 MiB).
    vmem_limit = int(min(max(budget, est + (4 << 20)), capacity))

    # Constant-index (resident) target blocks only need a single pipeline buffer.
    resident_kwargs = {}
    if grid_n == 1:
        resident_kwargs = dict(pipeline_mode=pl.Buffered(buffer_count=1))

    dist_sq, counts = pl.pallas_call(
        kernel,
        out_shape=(
            jax.ShapeDtypeStruct((Mp, Np), jnp.float32),
            jax.ShapeDtypeStruct((Mp, grid_n * LANE), jnp.int32),
        ),
        grid_spec=pltpu.PrefetchScalarGridSpec(
            num_scalar_prefetch=0,
            grid=(grid_m, grid_n),
            in_specs=[
                pl.BlockSpec((TM, Cp), lambda i, j: (i, 0)),                    # src slab
                pl.BlockSpec((Cp, TN), lambda i, j: (0, j), **resident_kwargs),  # tgt^T
                pl.BlockSpec((TM, 1), lambda i, j: (i, 0)),                     # row bias
                pl.BlockSpec((1, TN), lambda i, j: (0, j), **resident_kwargs),  # col bias
            ],
            out_specs=[
                pl.BlockSpec((TM, TN), lambda i, j: (i, j)),
                pl.BlockSpec((TM, LANE), lambda i, j: (i, j)),
            ],
        ),
        compiler_params=pltpu.CompilerParams(
            dimension_semantics=("parallel", "parallel"),
            vmem_limit_bytes=vmem_limit,
        ),
    )(src_p, tgtT_p, rbias, cbias)
    return dist_sq, counts, Np


class AdaptiveSuperPointMatching:
    """JAX/Pallas port of vision3d AdaptiveSuperPointMatching (no parameters)."""

    def __init__(self, min_num_correspondences, similarity_threshold,
                 max_correspondences=4096, compute_dtype=jnp.bfloat16,
                 use_approx_selection=True, recall_target=0.99):
        self.min_num_correspondences = int(min_num_correspondences)
        self.similarity_threshold = float(similarity_threshold)
        # Static cap on returned correspondences (fixed-length padded outputs).
        self.max_correspondences = int(max_correspondences)
        # Set compute_dtype=jnp.float32 to match the torch reference near the
        # threshold bit-for-bit.
        self.compute_dtype = compute_dtype
        # Large problems use lax.approx_min_k (single streaming pass) instead of
        # exact top_k; small problems always use the exact path.
        self.use_approx_selection = bool(use_approx_selection)
        self.recall_target = float(recall_target)

    def __call__(self, src_feats, tgt_feats, src_masks=None, tgt_masks=None):
        M = src_feats.shape[0]
        N = tgt_feats.shape[0]

        # Hot path: fused MXU squared-distance + {0,+inf} masking + count.
        dist_sq, counts, Np = pairwise_sqdist_and_count(
            src_feats, tgt_feats, src_masks, tgt_masks,
            self.similarity_threshold, self.compute_dtype)

        # Exact |{(i,j) valid : dist <= threshold}| from the in-kernel counts.
        count = jnp.sum(counts[:, ::LANE])

        valid_m = (jnp.sum(src_masks.astype(jnp.int32)) if src_masks is not None
                   else jnp.int32(M))
        valid_n = (jnp.sum(tgt_masks.astype(jnp.int32)) if tgt_masks is not None
                   else jnp.int32(N))
        k = jnp.minimum(jnp.int32(self.min_num_correspondences),
                        valid_m * valid_n)
        num_corr = jnp.maximum(count, k)

        # Selection over the padded flat matrix (+inf entries sort last and can
        # never enter the first num_corr slots since num_corr <= valid_m*valid_n).
        cap = int(min(self.max_correspondences, M * N))
        flat = dist_sq.reshape(-1)
        use_approx = (self.use_approx_selection and cap < flat.size
                      and flat.size >= (1 << 18))
        if use_approx:
            # TODO(synk): approximate selection (recall < 1) may miss entries
            # near the cutoff; set use_approx_selection=False for exact sets.
            sq_sel, idx = lax.approx_min_k(flat, cap,
                                           recall_target=self.recall_target)
        else:
            neg_sq, idx = lax.top_k(-flat, cap)       # ascending squared dists
            sq_sel = -neg_sq
        idx = idx.astype(jnp.int32)
        src_corr_indices = idx // Np
        tgt_corr_indices = idx % Np
        # Deferred sqrt: applied only to the `cap` selected values.
        corr_scores = jnp.exp(-jnp.sqrt(jnp.maximum(sq_sel, 0.0)))

        # TODO(synk): torch.nonzero / topk return data-dependent lengths; we
        # return fixed-length (cap) padded arrays + num_corr (truncated to the
        # cap smallest distances if the true count exceeds max_correspondences).
        num_ret = jnp.minimum(num_corr, jnp.int32(cap))
        slot_valid = jnp.arange(cap, dtype=jnp.int32) < num_ret
        src_corr_indices = jnp.where(slot_valid, src_corr_indices, -1)
        tgt_corr_indices = jnp.where(slot_valid, tgt_corr_indices, -1)
        corr_scores = jnp.where(slot_valid, corr_scores, 0.0)
        return src_corr_indices, tgt_corr_indices, corr_scores, num_corr


if __name__ == "__main__":
    key = jax.random.PRNGKey(0)
    k_src, k_tgt = jax.random.split(key)

    M, N, C = 40, 56, 64  # small synthetic shapes
    src_feats = jax.random.normal(k_src, (M, C), dtype=jnp.float32)
    tgt_feats = jax.random.normal(k_tgt, (N, C), dtype=jnp.float32)
    # pairwise_distance(..., normalized=True) assumes unit-norm features.
    src_feats = src_feats / jnp.linalg.norm(src_feats, axis=-1, keepdims=True)
    tgt_feats = tgt_feats / jnp.linalg.norm(tgt_feats, axis=-1, keepdims=True)

    # Deterministic masks: last few superpoints are "empty".
    src_masks = jnp.arange(M) < (M - 4)
    tgt_masks = jnp.arange(N) < (N - 6)

    module = AdaptiveSuperPointMatching(min_num_correspondences=32,
                                        similarity_threshold=1.2)
    src_idx, tgt_idx, scores, num_corr = module(
        src_feats, tgt_feats, src_masks=src_masks, tgt_masks=tgt_masks
    )
    jax.block_until_ready((src_idx, tgt_idx, scores, num_corr))
    print("KERNEL_OK")
</pallas_src>

<mosaic_0001>
module attributes {stable_mosaic.version = 11 : i64} {
  func.func @_sqdist_count_kernel(%arg0: i32, %arg1: i32, %arg2: memref<48x128xbf16, #tpu.memory_space<vmem>>, %arg3: memref<128x128xbf16, #tpu.memory_space<vmem>>, %arg4: memref<48x1xf32, #tpu.memory_space<vmem>>, %arg5: memref<1x128xf32, #tpu.memory_space<vmem>>, %arg6: memref<48x128xf32, #tpu.memory_space<vmem>>, %arg7: memref<48x128xi32, #tpu.memory_space<vmem>>) attributes {dimension_semantics = [#tpu.dimension_semantics<parallel>, #tpu.dimension_semantics<parallel>], iteration_bounds = array<i64: 1, 1>, scalar_prefetch = 0 : i64, scratch_operands = 0 : i64, tpu.core_type = #tpu.core_type<tc>, window_params = [{transform_indices = @transform_0, window_bounds = array<i64: 48, 128>}, {pipeline_mode = #tpu.pipeline_mode<synchronous>, transform_indices = @transform_1, window_bounds = array<i64: 128, 128>}, {transform_indices = @transform_2, window_bounds = array<i64: 48, 1>}, {pipeline_mode = #tpu.pipeline_mode<synchronous>, transform_indices = @transform_3, window_bounds = array<i64: 1, 128>}, {transform_indices = @transform_4, window_bounds = array<i64: 48, 128>}, {transform_indices = @transform_5, window_bounds = array<i64: 48, 128>}]} {
    %c0 = arith.constant 0 : index
    %c0_0 = arith.constant 0 : index
    %0 = vector.load %arg2[%c0, %c0_0] : memref<48x128xbf16, #tpu.memory_space<vmem>>, vector<48x128xbf16>
    %c0_1 = arith.constant 0 : index
    %c0_2 = arith.constant 0 : index
    %1 = vector.load %arg3[%c0_1, %c0_2] : memref<128x128xbf16, #tpu.memory_space<vmem>>, vector<128x128xbf16>
    %cst = arith.constant dense<0.000000e+00> : vector<48x128xf32>
    %2 = tpu.matmul %0, %1, %cst {dimension_numbers = #tpu.dot_dimension_numbers<[1], [0], [0], [1], [0, 0, 1, 1], [], []>} : vector<48x128xbf16>, vector<128x128xbf16>, vector<48x128xf32> -> vector<48x128xf32>
    %cst_3 = arith.constant 2.000000e+00 : f32
    %3 = vector.broadcast %cst_3 : f32 to vector<48x128xf32>
    %4 = arith.mulf %3, %2 : vector<48x128xf32>
    %cst_4 = arith.constant 2.000000e+00 : f32
    %5 = vector.broadcast %cst_4 : f32 to vector<48x128xf32>
    %6 = arith.subf %5, %4 : vector<48x128xf32>
    %cst_5 = arith.constant 0.000000e+00 : f32
    %7 = vector.broadcast %cst_5 : f32 to vector<48x128xf32>
    %8 = arith.maximumf %6, %7 : vector<48x128xf32>
    %c0_6 = arith.constant 0 : index
    %c0_7 = arith.constant 0 : index
    %9 = vector.load %arg4[%c0_6, %c0_7] : memref<48x1xf32, #tpu.memory_space<vmem>>, vector<48x1xf32>
    %10 = vector.broadcast %9 : vector<48x1xf32> to vector<48x128xf32>
    %11 = arith.addf %8, %10 : vector<48x128xf32>
    %c0_8 = arith.constant 0 : index
    %c0_9 = arith.constant 0 : index
    %12 = vector.load %arg5[%c0_8, %c0_9] : memref<1x128xf32, #tpu.memory_space<vmem>>, vector<1x128xf32>
    %13 = vector.broadcast %12 : vector<1x128xf32> to vector<48x128xf32>
    %14 = arith.addf %11, %13 : vector<48x128xf32>
    %c0_10 = arith.constant 0 : index
    %c0_11 = arith.constant 0 : index
    %15 = vector.load %arg6[%c0_10, %c0_11] : memref<48x128xf32, #tpu.memory_space<vmem>>, vector<48x128xf32>
    tpu.vector_store %arg6[%c0_10, %c0_11], %14 {strides = array<i32>} : memref<48x128xf32, #tpu.memory_space<vmem>>, vector<48x128xf32>,
    %cst_12 = arith.constant 1.440000e+00 : f32
    %16 = vector.broadcast %cst_12 : f32 to vector<48x128xf32>
    %17 = arith.cmpf ole, %14, %16 : vector<48x128xf32>
    %18 = arith.extui %17 : vector<48x128xi1> to vector<48x128xi32>
    %cst_13 = arith.constant dense<0> : vector<48xi32>
    %19 = vector.multi_reduction <add>, %18, %cst_13 [1] : vector<48x128xi32> to vector<48xi32>
    %20 = vector.shape_cast %19 : vector<48xi32> to vector<48x1xi32>
    %21 = vector.shape_cast %20 : vector<48x1xi32> to vector<48x1xi32>
    %22 = vector.broadcast %21 : vector<48x1xi32> to vector<48x128xi32>
    %c0_14 = arith.constant 0 : index
    %c0_15 = arith.constant 0 : index
    %23 = vector.load %arg7[%c0_14, %c0_15] : memref<48x128xi32, #tpu.memory_space<vmem>>, vector<48x128xi32>
    tpu.vector_store %arg7[%c0_14, %c0_15], %22 {strides = array<i32>} : memref<48x128xi32, #tpu.memory_space<vmem>>, vector<48x128xi32>,
    return
  }
  func.func @transform_0(%arg0: i32, %arg1: i32) -> (i32, i32) {
    %c0_i32 = arith.constant 0 : i32
    %c0_i32_0 = arith.constant 0 : i32
    return %arg0, %c0_i32 : i32, i32
  }
  func.func @transform_1(%arg0: i32, %arg1: i32) -> (i32, i32) {
    %c0_i32 = arith.constant 0 : i32
    %c0_i32_0 = arith.constant 0 : i32
    return %c0_i32, %arg1 : i32, i32
  }
  func.func @transform_2(%arg0: i32, %arg1: i32) -> (i32, i32) {
    %c0_i32 = arith.constant 0 : i32
    %c0_i32_0 = arith.constant 0 : i32
    return %arg0, %c0_i32 : i32, i32
  }
  func.func @transform_3(%arg0: i32, %arg1: i32) -> (i32, i32) {
    %c0_i32 = arith.constant 0 : i32
    %c0_i32_0 = arith.constant 0 : i32
    return %c0_i32, %arg1 : i32, i32
  }
  func.func @transform_4(%arg0: i32, %arg1: i32) -> (i32, i32) {
    %c0_i32 = arith.constant 0 : i32
    return %arg0, %arg1 : i32, i32
  }
  func.func @transform_5(%arg0: i32, %arg1: i32) -> (i32, i32) {
    %c0_i32 = arith.constant 0 : i32
    return %arg0, %arg1 : i32, i32
  }
}

</mosaic_0001>

<llo_original>
// kernel: tpu_custom_call.1
$region0: #{tpu_custom_call.1}
  #allocation0 [shape = 'u32[]', space=smem, size = 0x4, offset = 0x4, fixed_abs, tag = 'smem constant byte address 0x4 - core index']
  #allocation1 [shape = 'u32[144,128]{1,0:T(1,128)}', space=vmem, size = 0x12000, scoped, tag = 'internal scratch']
  %s0 = inlined_call_operand.vmem [shape: bf16[48,128], index: 0, kind: input, shape index: {}]
  %s1 = inlined_call_operand.hbm [shape: bf16[128,128], index: 1, kind: input, shape index: {}]
  %s2 = inlined_call_operand.vmem [shape: f32[48,1], index: 2, kind: input, shape index: {}]
  %s3 = inlined_call_operand.vmem [shape: f32[1,128], index: 3, kind: input, shape index: {}]
  %s4 = inlined_call_operand.hbm [shape: f32[48,128], index: 4, kind: output, shape index: {0}]
  %s5 = inlined_call_operand.hbm [shape: s32[48,128], index: 5, kind: output, shape index: {1}]
  %6 = xla_tuple %s4, %s5
  %s7 = sld [smem:[#allocation0]]
  $region38: #{tpu_custom_call.1} parent=0
    _
  %s9 = ssub.s32 1, %s7
  %s10 = scalar_select 0, %s9, %s7
  $region1: #{tpu_custom_call.1} parent=0
    #allocation2 [shape = 'u8[32768]{0}', space=vmem, size = 0x8000, scoped, tag = 'input window, operand 1, single buffered']
    #allocation3 [shape = 's32[1]{0}', space=sflag, size = 0x4, scoped, tag = 'scoped memory for tpu_custom_call.1']
    #allocation4 [shape = 's32[1]{0}', space=sflag, size = 0x4, scoped, tag = 'scoped memory for tpu_custom_call.1']
    #allocation5 [shape = 'u8[24576]{0}', space=vmem, size = 0x6000, scoped, tag = 'output window, operand 0, single buffered']
    #allocation6 [shape = 'u8[24576]{0}', space=vmem, size = 0x6000, scoped, tag = 'output window, operand 1, single buffered']
    #allocation7 [shape = 's32[1]{0}', space=sflag, size = 0x4, scoped, tag = 'scoped memory for tpu_custom_call.1']
    %11 = vsyncpa [#allocation3], 0
    %12 = vsyncpa [#allocation4], 0
    %13 = vsyncpa [#allocation7], 0
    // Predicated region
    $region2: #{tpu_custom_call.1} parent=1 // pred_check
      _
    $region3: #{tpu_custom_call.1} parent=1 // pred_check_branch
      %15 = sbr.rel (0) target = $region5
    $region4: #{tpu_custom_call.1} parent=1 // pred_region
      _
    $region5: #{tpu_custom_call.1} parent=1 // pred_fallthru
      _
    // Predicated region
    $region6: #{tpu_custom_call.1} parent=1 // pred_check
      _
    $region7: #{tpu_custom_call.1} parent=1 // pred_check_branch
      %17 = sbr.rel (0) target = $region9
    $region8: #{tpu_custom_call.1} parent=1 // pred_region
      %s19 = ssub.s32 1024, 1024
      %20 = vsyncadd [#allocation3], %s19
      %s21 = sshll.u32 [#allocation2], 4
      %s22 = int_to_ptr.vmem [resolvable:$true] %s21
      %27 = dma.hbm_to_vmem [thread:$0]  %s1, 1024, %s22, [#allocation3], 64, 64, 4
    $region9: #{tpu_custom_call.1} parent=1 // pred_fallthru
      _
    // Predicated region
    $region10: #{tpu_custom_call.1} parent=1 // pred_check
      _
    $region11: #{tpu_custom_call.1} parent=1 // pred_check_branch
      %29 = sbr.rel (0) target = $region13
    $region12: #{tpu_custom_call.1} parent=1 // pred_region
      _
    $region13: #{tpu_custom_call.1} parent=1 // pred_fallthru
      _
    // Predicated region
    $region14: #{tpu_custom_call.1} parent=1 // pred_check
      _
    $region15: #{tpu_custom_call.1} parent=1 // pred_check_branch
      %31 = sbr.rel (0) target = $region17
    $region16: #{tpu_custom_call.1} parent=1 // pred_region
      _
    $region17: #{tpu_custom_call.1} parent=1 // pred_fallthru
      _
    // Predicated region
    $region18: #{tpu_custom_call.1} parent=1 // pred_check
      _
    $region19: #{tpu_custom_call.1} parent=1 // pred_check_branch
      %33 = sbr.rel (0) target = $region21
    $region20: #{tpu_custom_call.1} parent=1 // pred_region
      %34 = dma.done [#allocation3], 1024
    $region21: #{tpu_custom_call.1} parent=1 // pred_fallthru
      _
    %v36 = vld [vmem:[%s0] sm:$0xf]
    %v37 = vld [vmem:[%s0 + $0x4] sm:$0xf]
    %v38 = vld [vmem:[%s0 + $0x8] sm:$0xf]
    %v39 = vld [vmem:[%s0 + $0xc] sm:$0xf]
    %v40 = vld [vmem:[%s0 + $0x10] sm:$0xf]
    %v41 = vld [vmem:[%s0 + $0x14] sm:$0xf]
    %v42 = vld [vmem:[#allocation2] sm:$0xf]
    %v43 = vld [vmem:[#allocation2 + $0x4] sm:$0xf]
    %v44 = vld [vmem:[#allocation2 + $0x8] sm:$0xf]
    %v45 = vld [vmem:[#allocation2 + $0xc] sm:$0xf]
    %v46 = vld [vmem:[#allocation2 + $0x10] sm:$0xf]
    %v47 = vld [vmem:[#allocation2 + $0x14] sm:$0xf]
    %v48 = vld [vmem:[#allocation2 + $0x18] sm:$0xf]
    %v49 = vld [vmem:[#allocation2 + $0x1c] sm:$0xf]
    %v50 = vld [vmem:[#allocation2 + $0x20] sm:$0xf]
    %v51 = vld [vmem:[#allocation2 + $0x24] sm:$0xf]
    %v52 = vld [vmem:[#allocation2 + $0x28] sm:$0xf]
    %v53 = vld [vmem:[#allocation2 + $0x2c] sm:$0xf]
    %v54 = vld [vmem:[#allocation2 + $0x30] sm:$0xf]
    %v55 = vld [vmem:[#allocation2 + $0x34] sm:$0xf]
    %v56 = vld [vmem:[#allocation2 + $0x38] sm:$0xf]
    %v57 = vld [vmem:[#allocation2 + $0x3c] sm:$0xf]
    %v64 = vunpack.c.l.b16 %v36
    %v65 = vunpack.c.l.b16 %v37
    %v66 = vunpack.c.l.b16 %v38
    %v67 = vunpack.c.l.b16 %v39
    %v68 = vunpack.c.l.b16 %v40
    %v69 = vunpack.c.l.b16 %v41
    %v70 = vpack.c.b16 %v65, %v64
    %v71 = vpack.c.b16 %v67, %v66
    %v72 = vpack.c.b16 %v69, %v68
    %v92 = vunpack.c.l.b16 %v42
    %v93 = vunpack.c.l.b16 %v43
    %v94 = vunpack.c.l.b16 %v44
    %v95 = vunpack.c.l.b16 %v45
    %v96 = vunpack.c.l.b16 %v46
    %v97 = vunpack.c.l.b16 %v47
    %v98 = vunpack.c.l.b16 %v48
    %v99 = vunpack.c.l.b16 %v49
    %v100 = vunpack.c.l.b16 %v50
    %v101 = vunpack.c.l.b16 %v51
    %v102 = vunpack.c.l.b16 %v52
    %v103 = vunpack.c.l.b16 %v53
    %v104 = vunpack.c.l.b16 %v54
    %v105 = vunpack.c.l.b16 %v55
    %v106 = vunpack.c.l.b16 %v56
    %v107 = vunpack.c.l.b16 %v57
    %v108 = vpack.c.b16 %v93, %v92
    %v109 = vpack.c.b16 %v95, %v94
    %v110 = vpack.c.b16 %v97, %v96
    %v111 = vpack.c.b16 %v99, %v98
    %v112 = vpack.c.b16 %v101, %v100
    %v113 = vpack.c.b16 %v103, %v102
    %v114 = vpack.c.b16 %v105, %v104
    %v115 = vpack.c.b16 %v107, %v106
    %124 = vmatprep.subr.bf16.mxu0 0
    %125 = vmatpush1.bf16.msra.mxu0 %v108
    %126 = vmatprep.subr.bf16.mxu0 0
    %127 = vmatpush1.bf16.msra.mxu0 %v109
    %128 = vmatprep.subr.bf16.mxu0 0
    %129 = vmatpush1.bf16.msra.mxu0 %v110
    %130 = vmatprep.subr.bf16.mxu0 0
    %131 = vmatpush1.bf16.msra.mxu0 %v111
    %132 = vmatprep.subr.bf16.mxu0 0
    %133 = vmatpush1.bf16.msra.mxu0 %v112
    %134 = vmatprep.subr.bf16.mxu0 0
    %135 = vmatpush1.bf16.msra.mxu0 %v113
    %136 = vmatprep.subr.bf16.mxu0 0
    %137 = vmatpush1.bf16.msra.mxu0 %v114
    %138 = vmatprep.subr.bf16.mxu0 0
    %139 = vmatpush1.bf16.msra.mxu0 %v115
    %140 = vmatprep.subr.bf16.mxu0 0
    %141 = vmatpush1.bf16.msra.mxu0 0
    %142 = vmatprep.subr.bf16.mxu0 0
    %143 = vmatpush1.bf16.msra.mxu0 0
    %144 = vmatprep.subr.bf16.mxu0 0
    %145 = vmatpush1.bf16.msra.mxu0 0
    %146 = vmatprep.subr.bf16.mxu0 0
    %147 = vmatpush1.bf16.msra.mxu0 0
    %148 = vmatprep.subr.bf16.mxu0 0
    %149 = vmatpush1.bf16.msra.mxu0 0
    %150 = vmatprep.subr.bf16.mxu0 0
    %151 = vmatpush1.bf16.msra.mxu0 0
    %152 = vmatprep.subr.bf16.mxu0 0
    %153 = vmatpush1.bf16.msra.mxu0 0
    %154 = vmatprep.subr.bf16.mxu0 0
    %155 = vmatpush1.bf16.msra.mxu0 0
    %156 = vmatprep.mubr.bf16.mxu0 0
    %157 = vmatmul.mubr.bf16.gmra.mrb[0].mxu0 %v70
    %v158 = vpop.f32.mrb[0].mxu0
    %v159 = vadd.f32 0.0, %v158
    %v160 = vpop.f32.mrb[0].mxu0
    %v161 = vpop.f32.mrb[0].mxu0
    %v162 = vadd.f32 0.0, %v161
    %v163 = vpop.f32.mrb[0].mxu0
    %164 = vmatprep.mubr.bf16.mxu0 0
    %165 = vmatmul.mubr.bf16.gmra.mrb[0].mxu0 %v71
    %v166 = vpop.f32.mrb[0].mxu0
    %v167 = vadd.f32 0.0, %v166
    %v168 = vpop.f32.mrb[0].mxu0
    %v169 = vpop.f32.mrb[0].mxu0
    %v170 = vadd.f32 0.0, %v169
    %v171 = vpop.f32.mrb[0].mxu0
    %172 = vmatprep.mubr.bf16.mxu0 0
    %173 = vmatmul.mubr.bf16.gmra.mrb[0].mxu0 %v72
    %v174 = vpop.f32.mrb[0].mxu0
    %v175 = vadd.f32 0.0, %v174
    %v176 = vpop.f32.mrb[0].mxu0
    %v177 = vpop.f32.mrb[0].mxu0
    %v178 = vadd.f32 0.0, %v177
    %v179 = vpop.f32.mrb[0].mxu0
    %180 = vdwg.mxu0
    %v181 = vmul.f32 %v159, 2.0
    %v182 = vmul.f32 %v162, 2.0
    %v183 = vmul.f32 %v167, 2.0
    %v184 = vmul.f32 %v170, 2.0
    %v185 = vmul.f32 %v175, 2.0
    %v186 = vmul.f32 %v178, 2.0
    %v187 = vsub.f32 2.0, %v181
    %v188 = vsub.f32 2.0, %v182
    %v189 = vsub.f32 2.0, %v183
    %v190 = vsub.f32 2.0, %v184
    %v191 = vsub.f32 2.0, %v185
    %v192 = vsub.f32 2.0, %v186
    %v193 = vmax.f32 %v187, 0.0
    %v194 = vmax.f32 %v188, 0.0
    %v195 = vmax.f32 %v189, 0.0
    %v196 = vmax.f32 %v190, 0.0
    %v197 = vmax.f32 %v191, 0.0
    %v198 = vmax.f32 %v192, 0.0
    %v199 = vld [vmem:[%s2] sm:$0xff]
    %v200 = vld [vmem:[%s2 + $0x8] sm:$0xff]
    %v201 = vld [vmem:[%s2 + $0x10] sm:$0xff]
    %v202 = vld [vmem:[%s2 + $0x18] sm:$0xff]
    %v203 = vld [vmem:[%s2 + $0x20] sm:$0xff]
    %v204 = vld [vmem:[%s2 + $0x28] sm:$0xff]
    %206 = vset.pattern.permute.xlu0 0
    %207 = vperm.xlu0 %206, %v199
    %v208 = vpop.permute.xlu0 %207
    %211 = vset.pattern.permute.xlu0 0
    %212 = vperm.xlu0 %211, %v200
    %v213 = vpop.permute.xlu0 %212
    %216 = vset.pattern.permute.xlu0 0
    %217 = vperm.xlu0 %216, %v201
    %v218 = vpop.permute.xlu0 %217
    %221 = vset.pattern.permute.xlu0 0
    %222 = vperm.xlu0 %221, %v202
    %v223 = vpop.permute.xlu0 %222
    %226 = vset.pattern.permute.xlu0 0
    %227 = vperm.xlu0 %226, %v203
    %v228 = vpop.permute.xlu0 %227
    %231 = vset.pattern.permute.xlu0 0
    %232 = vperm.xlu0 %231, %v204
    %v233 = vpop.permute.xlu0 %232
    %v235 = vadd.f32 %v193, %v208
    %v236 = vadd.f32 %v194, %v213
    %v237 = vadd.f32 %v195, %v218
    %v238 = vadd.f32 %v196, %v223
    %v239 = vadd.f32 %v197, %v228
    %v240 = vadd.f32 %v198, %v233
    %v241 = vld [vmem:[%s3] sm:$0x1]
    %v243 = vlaneseq
    %v244 = vshrl.u32 %v243, 7
    %v245 = vsub.s32 0, %v244
    %v246 = vrot.slane %v241, %v245
    %v248 = vadd.f32 %v235, %v246
    %v249 = vadd.f32 %v236, %v246
    %v250 = vadd.f32 %v237, %v246
    %v251 = vadd.f32 %v238, %v246
    %v252 = vadd.f32 %v239, %v246
    %v253 = vadd.f32 %v240, %v246
    %254 = vst [vmem:[#allocation5] sm:$0xff] %v248
    %255 = vst [vmem:[#allocation5 + $0x8] sm:$0xff] %v249
    %256 = vst [vmem:[#allocation5 + $0x10] sm:$0xff] %v250
    %257 = vst [vmem:[#allocation5 + $0x18] sm:$0xff] %v251
    %258 = vst [vmem:[#allocation5 + $0x20] sm:$0xff] %v252
    %259 = vst [vmem:[#allocation5 + $0x28] sm:$0xff] %v253
    %vm260 = vcmp.le.f32.partialorder %v248, 1.44
    %vm261 = vcmp.le.f32.partialorder %v249, 1.44
    %vm262 = vcmp.le.f32.partialorder %v250, 1.44
    %vm263 = vcmp.le.f32.partialorder %v251, 1.44
    %vm264 = vcmp.le.f32.partialorder %v252, 1.44
    %vm265 = vcmp.le.f32.partialorder %v253, 1.44
    %v266 = vsel %vm260, 1, 0
    %v267 = vsel %vm261, 1, 0
    %v268 = vsel %vm262, 1, 0
    %v269 = vsel %vm263, 1, 0
    %v270 = vsel %vm264, 1, 0
    %v271 = vsel %vm265, 1, 0
    %v272 = vand.u32 %v266, 65535
    %v273 = vshrl.u32 %v266, 16
    %v274 = vcvt.s32.f32 %v272
    %v275 = vcvt.s32.f32 %v273
    %276 = vadd.xlane.f32.xlu0 %v274
    %v277 = vpop.xlane.xlu0 %276
    %278 = vadd.xlane.f32.xlu0 %v275
    %v279 = vpop.xlane.xlu0 %278
    %v280 = vcvt.f32.s32 %v277
    %v281 = vcvt.f32.s32 %v279
    %v282 = vshll.u32 %v281, 16
    %v283 = vadd.s32 %v282, %v280
    %v284 = vand.u32 %v267, 65535
    %v285 = vshrl.u32 %v267, 16
    %v286 = vcvt.s32.f32 %v284
    %v287 = vcvt.s32.f32 %v285
    %288 = vadd.xlane.f32.xlu0 %v286
    %v289 = vpop.xlane.xlu0 %288
    %290 = vadd.xlane.f32.xlu0 %v287
    %v291 = vpop.xlane.xlu0 %290
    %v292 = vcvt.f32.s32 %v289
    %v293 = vcvt.f32.s32 %v291
    %v294 = vshll.u32 %v293, 16
    %v295 = vadd.s32 %v294, %v292
    %v296 = vand.u32 %v268, 65535
    %v297 = vshrl.u32 %v268, 16
    %v298 = vcvt.s32.f32 %v296
    %v299 = vcvt.s32.f32 %v297
    %300 = vadd.xlane.f32.xlu0 %v298
    %v301 = vpop.xlane.xlu0 %300
    %302 = vadd.xlane.f32.xlu0 %v299
    %v303 = vpop.xlane.xlu0 %302
    %v304 = vcvt.f32.s32 %v301
    %v305 = vcvt.f32.s32 %v303
    %v306 = vshll.u32 %v305, 16
    %v307 = vadd.s32 %v306, %v304
    %v308 = vand.u32 %v269, 65535
    %v309 = vshrl.u32 %v269, 16
    %v310 = vcvt.s32.f32 %v308
    %v311 = vcvt.s32.f32 %v309
    %312 = vadd.xlane.f32.xlu0 %v310
    %v313 = vpop.xlane.xlu0 %312
    %314 = vadd.xlane.f32.xlu0 %v311
    %v315 = vpop.xlane.xlu0 %314
    %v316 = vcvt.f32.s32 %v313
    %v317 = vcvt.f32.s32 %v315
    %v318 = vshll.u32 %v317, 16
    %v319 = vadd.s32 %v318, %v316
    %v320 = vand.u32 %v270, 65535
    %v321 = vshrl.u32 %v270, 16
    %v322 = vcvt.s32.f32 %v320
    %v323 = vcvt.s32.f32 %v321
    %324 = vadd.xlane.f32.xlu0 %v322
    %v325 = vpop.xlane.xlu0 %324
    %326 = vadd.xlane.f32.xlu0 %v323
    %v327 = vpop.xlane.xlu0 %326
    %v328 = vcvt.f32.s32 %v325
    %v329 = vcvt.f32.s32 %v327
    %v330 = vshll.u32 %v329, 16
    %v331 = vadd.s32 %v330, %v328
    %v332 = vand.u32 %v271, 65535
    %v333 = vshrl.u32 %v271, 16
    %v334 = vcvt.s32.f32 %v332
    %v335 = vcvt.s32.f32 %v333
    %336 = vadd.xlane.f32.xlu0 %v334
    %v337 = vpop.xlane.xlu0 %336
    %338 = vadd.xlane.f32.xlu0 %v335
    %v339 = vpop.xlane.xlu0 %338
    %v340 = vcvt.f32.s32 %v337
    %v341 = vcvt.f32.s32 %v339
    %v342 = vshll.u32 %v341, 16
    %v343 = vadd.s32 %v342, %v340
    %344 = vst [vmem:[#allocation6] sm:$0xff] %v283
    %345 = vst [vmem:[#allocation6 + $0x8] sm:$0xff] %v295
    %346 = vst [vmem:[#allocation6 + $0x10] sm:$0xff] %v307
    %347 = vst [vmem:[#allocation6 + $0x18] sm:$0xff] %v319
    %348 = vst [vmem:[#allocation6 + $0x20] sm:$0xff] %v331
    %349 = vst [vmem:[#allocation6 + $0x28] sm:$0xff] %v343
    // Predicated region
    $region22: #{tpu_custom_call.1} parent=1 // pred_check
      _
    $region23: #{tpu_custom_call.1} parent=1 // pred_check_branch
      %351 = sbr.rel (0) target = $region25
    $region24: #{tpu_custom_call.1} parent=1 // pred_region
      %s353 = ssub.s32 768, 768
      %354 = vsyncadd [#allocation4], %s353
      %s355 = sshll.u32 [#allocation5], 4
      %s356 = int_to_ptr.vmem [resolvable:$true] %s355
      %361 = dma.vmem_to_hbm [thread:$0]  %s356, 768, %s4, [#allocation4], 128, 128, 8
    $region25: #{tpu_custom_call.1} parent=1 // pred_fallthru
      _
    // Predicated region
    $region26: #{tpu_custom_call.1} parent=1 // pred_check
      _
    $region27: #{tpu_custom_call.1} parent=1 // pred_check_branch
      %363 = sbr.rel (0) target = $region29
    $region28: #{tpu_custom_call.1} parent=1 // pred_region
      %s365 = ssub.s32 768, 768
      %366 = vsyncadd [#allocation7], %s365
      %s367 = sshll.u32 [#allocation6], 4
      %s368 = int_to_ptr.vmem [resolvable:$true] %s367
      %373 = dma.vmem_to_hbm [thread:$0]  %s368, 768, %s5, [#allocation7], 128, 128, 8
    $region29: #{tpu_custom_call.1} parent=1 // pred_fallthru
      _
    // Predicated region
    $region30: #{tpu_custom_call.1} parent=1 // pred_check
      _
    $region31: #{tpu_custom_call.1} parent=1 // pred_check_branch
      %375 = sbr.rel (0) target = $region33
    $region32: #{tpu_custom_call.1} parent=1 // pred_region
      %376 = dma.done [#allocation4], 768
    $region33: #{tpu_custom_call.1} parent=1 // pred_fallthru
      _
    // Predicated region
    $region34: #{tpu_custom_call.1} parent=1 // pred_check
      _
    $region35: #{tpu_custom_call.1} parent=1 // pred_check_branch
      %378 = sbr.rel (0) target = $region37
    $region36: #{tpu_custom_call.1} parent=1 // pred_region
      %379 = dma.done [#allocation7], 768
    $region37: #{tpu_custom_call.1} parent=1 // pred_fallthru
      _
    %380 = vsyncpa [#allocation3], 1
    %381 = vsyncpa [#allocation4], 1
    %382 = vsyncpa [#allocation7], 1

</llo_original>
